<compile_context>
chip_gen: v7x
topology: tpu7x:2x2x1
jax: 0.10.0
libtpu: 0.0.40
codegen_flags: <defaults>
</compile_context>

<pallas_src>
import functools

import jax
import jax.numpy as jnp
from jax.experimental import pallas as pl
from jax.experimental.pallas import tpu as pltpu

_LANE = 128   # lanes per vreg (minor dim)
_SUB = 8      # sublanes per vreg (second-minor dim)


def _dlinear_kernel(w_ref, b_ref, sel_ref, x_ref, o_ref):
    """One batch tile of y = x @ W.T + b, features interleaved on lanes.

    w_ref:   (1, IN*128)   f32, VMEM  lane-tiled weights: w_ref[0, IN*c + i] = W[0, i]
    b_ref:   (1,)          f32, SMEM  bias
    sel_ref: (IN*128, 128) bf16, VMEM block-diagonal 0/1 de-interleave+sum matrix
    x_ref:   (TR, IN*128)  f32, VMEM  TR*128 batch rows in natural (batch-major) order
    o_ref:   (TR, 128)     f32, VMEM  lane-dense outputs in natural batch order
    """
    x = x_ref[...]
    # Exact f32 products on the VPU (weights broadcast along sublanes).
    p = x * w_ref[...]
    # hi/lo bf16 split so the MXU pass that performs the IN-way lane
    # de-interleave + sum (0/1 block-diagonal contraction) is bit-faithful to
    # ~2^-17 relative — no reliance on f32-matmul emulation precision.
    p_hi = p.astype(jnp.bfloat16)
    p_lo = (p - p_hi.astype(jnp.float32)).astype(jnp.bfloat16)
    sel = sel_ref[...]
    acc = jnp.dot(p_hi, sel, preferred_element_type=jnp.float32)
    acc = acc + jnp.dot(p_lo, sel, preferred_element_type=jnp.float32)
    o_ref[...] = (acc + b_ref[0]).astype(o_ref.dtype)


@functools.partial(jax.jit, static_argnames=("tile_rows",))
def dlinear_forward(x, weight, bias, *, tile_rows=2048):
    """y = x @ weight.T + bias  (PyTorch nn.Linear semantics).

    x:      (B, IN)   float32
    weight: (OUT, IN) float32   (PyTorch layout), OUT must be 1 (DLinear spec)
    bias:   (OUT,)    float32
    returns (B, OUT)  float32
    """
    B, IN = x.shape
    OUT, IN_w = weight.shape
    assert IN == IN_w and bias.shape == (OUT,)
    assert OUT == 1, "kernel specialises nn.Linear(IN, 1) as in the DLinear spec"

    row = IN * _LANE          # x floats per 128 batch elements (one output row)
    blk_b = _SUB * _LANE      # 1024: batches per (8,128)-aligned row group

    # ---- input view: zero-copy when B is a multiple of 1024 ------------------
    x_flat = x.reshape(-1)                               # metadata-only (row-major)
    B_pad = ((B + blk_b - 1) // blk_b) * blk_b
    if B_pad != B:
        # TODO(synk): ragged tail pays one extra copy of x; feed B as a multiple
        # of 1024 (or add an in-kernel masked last tile) to keep the zero-copy path.
        x_flat = jnp.zeros((B_pad * IN,), x.dtype).at[: B * IN].set(x_flat)
    R = B_pad // _LANE                                   # rows; multiple of 8
    x_view = x_flat.reshape(R, row)                      # free contiguous reshape

    # ---- small constants ------------------------------------------------------
    # Lane-tiled weights: position IN*c + i  ->  W[0, i]  (matches x_view layout).
    w_lane = jnp.tile(weight, (1, _LANE)).astype(jnp.float32)        # (1, IN*128)
    # Block-diagonal 0/1 selection: sel[p, c] = 1  iff  p // IN == c.
    sel = (jnp.arange(row, dtype=jnp.int32)[:, None] // IN
           == jnp.arange(_LANE, dtype=jnp.int32)[None, :]).astype(jnp.bfloat16)

    # ---- tiling ---------------------------------------------------------------
    # Default ~4 MiB of x + 1 MiB of out per grid step (amortises the ~0.35 us
    # per-step overhead); double-buffered total ~10 MiB fits every generation's
    # default scoped VMEM (16 MiB v5e, 32 MiB v6e/v7x, 64 MiB-physical v7x).
    tr = max(_SUB, (min(tile_rows, R) // _SUB) * _SUB)
    if R >= 2 * _SUB and -(-R // tr) < 2:
        tr = -(-R // (2 * _SUB)) * _SUB   # guarantee >=2 steps: both v7x TensorCores
    grid = (-(-R // tr),)                  # partial last tile handled by Pallas masking

    out_view = pl.pallas_call(
        _dlinear_kernel,
        out_shape=jax.ShapeDtypeStruct((R, _LANE), x.dtype),
        grid=grid,
        in_specs=[
            pl.BlockSpec((1, row), lambda i: (0, 0)),              # w_lane (resident)
            pl.BlockSpec(memory_space=pltpu.MemorySpace.SMEM),     # bias
            pl.BlockSpec((row, _LANE), lambda i: (0, 0)),          # sel (resident)
            pl.BlockSpec((tr, row), lambda i: (i, 0)),             # x tile
        ],
        out_specs=pl.BlockSpec((tr, _LANE), lambda i: (i, 0)),
        compiler_params=pltpu.CompilerParams(
            dimension_semantics=("parallel",),
        ),
        cost_estimate=pl.CostEstimate(
            flops=2 * B * IN * OUT,
            transcendentals=0,
            bytes_accessed=4 * (B * IN + B * OUT),
        ),
    )(w_lane, bias.astype(jnp.float32), sel, x_view)

    # Metadata-only un-pack: slice the padded tail (identity when B % 1024 == 0)
    # and reshape to PyTorch's (B, 1).  No transpose anywhere on the output path.
    return out_view.reshape(-1)[:B].reshape(B, OUT)


if __name__ == "__main__":
    input_len = 4
    output_dim = 1

    key = jax.random.PRNGKey(0)
    kx, kw, kb, kx2 = jax.random.split(key, 4)

    bound = 1.0 / (input_len ** 0.5)   # nn.Linear default init range
    weight = jax.random.uniform(kw, (output_dim, input_len), jnp.float32,
                                minval=-bound, maxval=bound)
    bias = jax.random.uniform(kb, (output_dim,), jnp.float32,
                              minval=-bound, maxval=bound)

    def ref(xv):
        # Exact f32 reference for y = x @ W.T + b (pure elementwise + reduce).
        return jnp.sum(xv * weight[0][None, :], axis=1, keepdims=True) + bias

    # Main case: batch a multiple of 1024 -> zero-copy input path, 2 grid steps.
    x = jax.random.normal(kx, (2048, input_len), jnp.float32)
    y = jax.block_until_ready(dlinear_forward(x, weight, bias))
    assert y.shape == (2048, output_dim)
    assert jnp.allclose(y, ref(x), atol=5e-4, rtol=5e-4)

    # Ragged case: exercises the padded fallback path.
    x2 = jax.random.normal(kx2, (100, input_len), jnp.float32)
    y2 = jax.block_until_ready(dlinear_forward(x2, weight, bias))
    assert y2.shape == (100, output_dim)
    assert jnp.allclose(y2, ref(x2), atol=5e-4, rtol=5e-4)

    print("KERNEL_OK")
</pallas_src>

<mosaic_0001>
module attributes {stable_mosaic.version = 11 : i64} {
  func.func @_dlinear_kernel(%arg0: i32, %arg1: memref<1x512xf32, #tpu.memory_space<vmem>>, %arg2: memref<1xf32, #tpu.memory_space<smem>>, %arg3: memref<512x128xbf16, #tpu.memory_space<vmem>>, %arg4: memref<8x512xf32, #tpu.memory_space<vmem>>, %arg5: memref<8x128xf32, #tpu.memory_space<vmem>>) attributes {dimension_semantics = [#tpu.dimension_semantics<parallel>], iteration_bounds = array<i64: 2>, scalar_prefetch = 0 : i64, scratch_operands = 0 : i64, tpu.core_type = #tpu.core_type<tc>, window_params = [{pipeline_mode = #tpu.pipeline_mode<synchronous>, transform_indices = @transform_0, window_bounds = array<i64: 1, 512>}, {transform_indices = @transform_1, window_bounds = array<i64: 1>}, {pipeline_mode = #tpu.pipeline_mode<synchronous>, transform_indices = @transform_2, window_bounds = array<i64: 512, 128>}, {transform_indices = @transform_3, window_bounds = array<i64: 8, 512>}, {transform_indices = @transform_4, window_bounds = array<i64: 8, 128>}]} {
    %c0 = arith.constant 0 : index
    %c0_0 = arith.constant 0 : index
    %0 = vector.load %arg4[%c0, %c0_0] : memref<8x512xf32, #tpu.memory_space<vmem>>, vector<8x512xf32>
    %c0_1 = arith.constant 0 : index
    %c0_2 = arith.constant 0 : index
    %1 = vector.load %arg1[%c0_1, %c0_2] : memref<1x512xf32, #tpu.memory_space<vmem>>, vector<1x512xf32>
    %2 = vector.broadcast %1 : vector<1x512xf32> to vector<8x512xf32>
    %3 = arith.mulf %0, %2 : vector<8x512xf32>
    %4 = arith.truncf %3 : vector<8x512xf32> to vector<8x512xbf16>
    %5 = arith.extf %4 : vector<8x512xbf16> to vector<8x512xf32>
    %6 = arith.subf %3, %5 : vector<8x512xf32>
    %7 = arith.truncf %6 : vector<8x512xf32> to vector<8x512xbf16>
    %c0_3 = arith.constant 0 : index
    %c0_4 = arith.constant 0 : index
    %8 = vector.load %arg3[%c0_3, %c0_4] : memref<512x128xbf16, #tpu.memory_space<vmem>>, vector<512x128xbf16>
    %cst = arith.constant dense<0.000000e+00> : vector<8x128xf32>
    %9 = tpu.matmul %4, %8, %cst {dimension_numbers = #tpu.dot_dimension_numbers<[1], [0], [0], [1], [0, 0, 1, 1], [], []>} : vector<8x512xbf16>, vector<512x128xbf16>, vector<8x128xf32> -> vector<8x128xf32>
    %cst_5 = arith.constant dense<0.000000e+00> : vector<8x128xf32>
    %10 = tpu.matmul %7, %8, %cst_5 {dimension_numbers = #tpu.dot_dimension_numbers<[1], [0], [0], [1], [0, 0, 1, 1], [], []>} : vector<8x512xbf16>, vector<512x128xbf16>, vector<8x128xf32> -> vector<8x128xf32>
    %11 = arith.addf %9, %10 : vector<8x128xf32>
    %c0_6 = arith.constant 0 : index
    %12 = memref.load %arg2[%c0_6] : memref<1xf32, #tpu.memory_space<smem>>
    %13 = vector.broadcast %12 : f32 to vector<8x128xf32>
    %14 = arith.addf %11, %13 : vector<8x128xf32>
    %c0_7 = arith.constant 0 : index
    %c0_8 = arith.constant 0 : index
    %15 = vector.load %arg5[%c0_7, %c0_8] : memref<8x128xf32, #tpu.memory_space<vmem>>, vector<8x128xf32>
    tpu.vector_store %arg5[%c0_7, %c0_8], %14 {strides = array<i32>} : memref<8x128xf32, #tpu.memory_space<vmem>>, vector<8x128xf32>,
    return
  }
  func.func @transform_0(%arg0: i32) -> (i32, i32) {
    %c0_i32 = arith.constant 0 : i32
    %c0_i32_0 = arith.constant 0 : i32
    %c0_i32_1 = arith.constant 0 : i32
    return %c0_i32, %c0_i32_0 : i32, i32
  }
  func.func @transform_1(%arg0: i32) -> i32 {
    %c0_i32 = arith.constant 0 : i32
    %c0_i32_0 = arith.constant 0 : i32
    return %c0_i32 : i32
  }
  func.func @transform_2(%arg0: i32) -> (i32, i32) {
    %c0_i32 = arith.constant 0 : i32
    %c0_i32_0 = arith.constant 0 : i32
    %c0_i32_1 = arith.constant 0 : i32
    return %c0_i32, %c0_i32_0 : i32, i32
  }
  func.func @transform_3(%arg0: i32) -> (i32, i32) {
    %c0_i32 = arith.constant 0 : i32
    %c0_i32_0 = arith.constant 0 : i32
    return %arg0, %c0_i32 : i32, i32
  }
  func.func @transform_4(%arg0: i32) -> (i32, i32) {
    %c0_i32 = arith.constant 0 : i32
    %c0_i32_0 = arith.constant 0 : i32
    return %arg0, %c0_i32 : i32, i32
  }
}

</mosaic_0001>

<llo_original>
// kernel: dlinear_forward.1
$region0: #{dlinear_forward.1}
  #allocation0 [shape = 'u32[]', space=smem, size = 0x4, offset = 0x4, fixed_abs, tag = 'smem constant byte address 0x4 - core index']
  #allocation1 [shape = 'u32[144,128]{1,0:T(1,128)}', space=vmem, size = 0x12000, scoped, tag = 'internal scratch']
  #allocation2 [shape = 'f32[1]{0:T(128)S(6)}', space=smem, size = 0x200, scoped, tag = 'scoped memory for dlinear_forward.1']
  %s0 = inlined_call_operand.vmem [shape: f32[1,512], index: 0, kind: input, shape index: {}]
  %s1 = inlined_call_operand.<no memory space> [shape: f32[1], index: 1, kind: input, shape index: {}]
  %s2 = inlined_call_operand.vmem [shape: bf16[512,128], index: 2, kind: input, shape index: {}]
  %s3 = inlined_call_operand.vmem [shape: f32[16,512], index: 3, kind: input, shape index: {}]
  %s4 = inlined_call_operand.hbm [shape: f32[16,128], index: 4, kind: output, shape index: {}]
  %s5 = sld [smem:[#allocation0]]
  $region49: #{dlinear_forward.1} parent=0
    _
  %s7 = ssub.s32 1, %s5
  %s8 = scalar_select 0, %s7, %s5
  %9 = sst [smem:[#allocation2]] %s1
  $region1: #{dlinear_forward.1} parent=0
    #allocation3 [shape = 'u8[8192]{0}', space=vmem, size = 0x2000, scoped, tag = 'output window, operand 0']
    #allocation4 [shape = 's32[2]{0}', space=sflag, size = 0x8, scoped, tag = 'scoped memory for dlinear_forward.1']
    %10 = vsyncpa [#allocation4], 0
    %s11 = scalar_lea.sflag [#allocation4], 1
    %12 = vsyncpa %s11, 0
    loop: start=0, step=1, limit=4
    $region2: #{dlinear_forward.1} parent=1 // loop_pre_header
      _
    $region3: #{dlinear_forward.1} parent=1 // loop_header
      %s14 = sphi 0, %s18
      %p15 = scmp.ge.s32.totalorder %s14, 4
      %s22 = sphi 0, %s22
      %s24 = sphi 0, %s22
      %s25 = sphi 0, %s24
      %s39 = sphi 0, %s25
      %s43 = sphi 0, %s43
      %s45 = sphi 0, %s43
      %s46 = sphi 0, %s45
      %s60 = sphi 0, %s46
      %s64 = sphi 0, %s64
      %s66 = sphi 0, %s64
      %s67 = sphi 0, %s66
      %s81 = sphi 0, %s67
      %s87 = sphi 0, %s89
      %s90 = sphi 0, %s87
      %s91 = sphi 0, %s90
      %s107 = sphi 0, %s91
      %s113 = sphi 0, %s115
      %s116 = sphi 0, %s113
      %s117 = sphi 0, %s116
      %s133 = sphi 0, %s117
    $region4: #{dlinear_forward.1} parent=1 // loop_header_branch
      %17 = sbr.rel (%p15) target = $region8
    $region5: #{dlinear_forward.1} parent=1 // loop_body
      %s19 = ssub.s32 %s14, 1
      %s20 = ssub.s32 %s14, 2
      %s21 = sadd.s32 %s14, 1
      %s23 = sadd.s32 %s22, 1
      %p26 = scmp.eq.s32.totalorder %s14, 1
      %p27 = scmp.ne.s32.totalorder %s22, %s24
      %p28 = scmp.eq.s32.totalorder %s14, 0
      %p29 = por %p27, %p28
      %p30 = scmp.ne.s32.totalorder %s22, %s24
      %p31 = scmp.eq.s32.totalorder %s19, 1
      %p32 = por %p30, %p31
      %p33 = scmp.ne.s32.totalorder %s24, %s25
      %p34 = scmp.eq.s32.totalorder %s19, 0
      %p35 = por %p33, %p34
      %p36 = scmp.ne.s32.totalorder %s24, %s25
      %p37 = scmp.eq.s32.totalorder %s20, 1
      %p38 = por %p36, %p37
      %p40 = scmp.ne.s32.totalorder %s25, %s39
      %p41 = scmp.eq.s32.totalorder %s20, 0
      %p42 = por %p40, %p41
      %s44 = sadd.s32 %s43, 1
      %p47 = scmp.eq.s32.totalorder %s14, 1
      %p48 = scmp.ne.s32.totalorder %s43, %s45
      %p49 = scmp.eq.s32.totalorder %s14, 0
      %p50 = por %p48, %p49
      %p51 = scmp.ne.s32.totalorder %s43, %s45
      %p52 = scmp.eq.s32.totalorder %s19, 1
      %p53 = por %p51, %p52
      %p54 = scmp.ne.s32.totalorder %s45, %s46
      %p55 = scmp.eq.s32.totalorder %s19, 0
      %p56 = por %p54, %p55
      %p57 = scmp.ne.s32.totalorder %s45, %s46
      %p58 = scmp.eq.s32.totalorder %s20, 1
      %p59 = por %p57, %p58
      %p61 = scmp.ne.s32.totalorder %s46, %s60
      %p62 = scmp.eq.s32.totalorder %s20, 0
      %p63 = por %p61, %p62
      %s65 = sadd.s32 %s64, 1
      %p68 = scmp.eq.s32.totalorder %s14, 1
      %p69 = scmp.ne.s32.totalorder %s64, %s66
      %p70 = scmp.eq.s32.totalorder %s14, 0
      %p71 = por %p69, %p70
      %p72 = scmp.ne.s32.totalorder %s64, %s66
      %p73 = scmp.eq.s32.totalorder %s19, 1
      %p74 = por %p72, %p73
      %p75 = scmp.ne.s32.totalorder %s66, %s67
      %p76 = scmp.eq.s32.totalorder %s19, 0
      %p77 = por %p75, %p76
      %p78 = scmp.ne.s32.totalorder %s66, %s67
      %p79 = scmp.eq.s32.totalorder %s20, 1
      %p80 = por %p78, %p79
      %p82 = scmp.ne.s32.totalorder %s67, %s81
      %p83 = scmp.eq.s32.totalorder %s20, 0
      %p84 = por %p82, %p83
      %s85 = ssub.s32 %s14, %s21
      %p86 = scmp.eq.s32.totalorder %s85, 0
      %s88 = sadd.s32 %s87, 1
      %s89 = scalar_select %p86, %s87, %s88
      %p92 = pneg %p86
      %p93 = scmp.eq.s32.totalorder %s14, 1
      %p94 = por %p92, %p93
      %p95 = scmp.ne.s32.totalorder %s87, %s90
      %p96 = scmp.eq.s32.totalorder %s14, 0
      %p97 = por %p95, %p96
      %p98 = scmp.ne.s32.totalorder %s87, %s90
      %p99 = scmp.eq.s32.totalorder %s19, 1
      %p100 = por %p98, %p99
      %p101 = scmp.ne.s32.totalorder %s90, %s91
      %p102 = scmp.eq.s32.totalorder %s19, 0
      %p103 = por %p101, %p102
      %p104 = scmp.ne.s32.totalorder %s90, %s91
      %p105 = scmp.eq.s32.totalorder %s20, 1
      %p106 = por %p104, %p105
      %p108 = scmp.ne.s32.totalorder %s91, %s107
      %p109 = scmp.eq.s32.totalorder %s20, 0
      %p110 = por %p108, %p109
      %s111 = ssub.s32 %s14, %s21
      %p112 = scmp.eq.s32.totalorder %s111, 0
      %s114 = sadd.s32 %s113, 1
      %s115 = scalar_select %p112, %s113, %s114
      %p118 = pneg %p112
      %p119 = scmp.eq.s32.totalorder %s14, 1
      %p120 = por %p118, %p119
      %p121 = scmp.ne.s32.totalorder %s113, %s116
      %p122 = scmp.eq.s32.totalorder %s14, 0
      %p123 = por %p121, %p122
      %p124 = scmp.ne.s32.totalorder %s113, %s116
      %p125 = scmp.eq.s32.totalorder %s19, 1
      %p126 = por %p124, %p125
      %p127 = scmp.ne.s32.totalorder %s116, %s117
      %p128 = scmp.eq.s32.totalorder %s19, 0
      %p129 = por %p127, %p128
      %p130 = scmp.ne.s32.totalorder %s116, %s117
      %p131 = scmp.eq.s32.totalorder %s20, 1
      %p132 = por %p130, %p131
      %p134 = scmp.ne.s32.totalorder %s117, %s133
      %p135 = scmp.eq.s32.totalorder %s20, 0
      %p136 = por %p134, %p135
      %p137 = scmp.le.s32.totalorder 1, %s14
      %p138 = scmp.lt.s32.totalorder %s14, 3
      %p139 = pnand %p137, %p138
      %p140 = pneg %p139
      // Predicated region
      $region9: #{dlinear_forward.1} parent=5 // pred_check
        _
      $region10: #{dlinear_forward.1} parent=5 // pred_check_branch
        %142 = sbr.rel (%p139) target = $region12
      $region11: #{dlinear_forward.1} parent=5 // pred_region
        %s143 = ssub.s32 %s14, 1
        // Predicated region
        $region13: #{dlinear_forward.1} parent=11 // pred_check
          %p144 = pneg %p35
        $region14: #{dlinear_forward.1} parent=11 // pred_check_branch
          %146 = sbr.rel (%p144) target = $region16
        $region15: #{dlinear_forward.1} parent=11 // pred_region
          _
        $region16: #{dlinear_forward.1} parent=11 // pred_fallthru
          _
        // Predicated region
        $region17: #{dlinear_forward.1} parent=11 // pred_check
          %p147 = pneg %p56
        $region18: #{dlinear_forward.1} parent=11 // pred_check_branch
          %149 = sbr.rel (%p147) target = $region20
        $region19: #{dlinear_forward.1} parent=11 // pred_region
          _
        $region20: #{dlinear_forward.1} parent=11 // pred_fallthru
          _
        // Predicated region
        $region21: #{dlinear_forward.1} parent=11 // pred_check
          %p150 = pneg %p77
        $region22: #{dlinear_forward.1} parent=11 // pred_check_branch
          %152 = sbr.rel (%p150) target = $region24
        $region23: #{dlinear_forward.1} parent=11 // pred_region
          _
        $region24: #{dlinear_forward.1} parent=11 // pred_fallthru
          _
      $region12: #{dlinear_forward.1} parent=5 // pred_fallthru
        _
      %p153 = scmp.lt.s32.totalorder %s14, 2
      // Predicated region
      $region25: #{dlinear_forward.1} parent=5 // pred_check
        %p154 = pneg %p153
      $region26: #{dlinear_forward.1} parent=5 // pred_check_branch
        %156 = sbr.rel (%p154) target = $region28
      $region27: #{dlinear_forward.1} parent=5 // pred_region
        // Predicated region
        $region29: #{dlinear_forward.1} parent=27 // pred_check
          %p157 = pneg %p97
        $region30: #{dlinear_forward.1} parent=27 // pred_check_branch
          %159 = sbr.rel (%p157) target = $region32
        $region31: #{dlinear_forward.1} parent=27 // pred_region
          %p160 = scmp.lt.s32.totalorder %s14, 1
          %s161 = scalar_select %p160, %s14, 1
          %s162 = smul.addr %s161, 4
          %s163 = smul.addr %s162, 8
          %s164 = scalar_lea.vmem %s3, %s163
        $region32: #{dlinear_forward.1} parent=27 // pred_fallthru
          _
      $region28: #{dlinear_forward.1} parent=5 // pred_fallthru
        _
      %p165 = scmp.le.s32.totalorder 1, %s14
      %p166 = scmp.lt.s32.totalorder %s14, 3
      %p167 = pnand %p165, %p166
      %p168 = pneg %p167
      // Predicated region
      $region33: #{dlinear_forward.1} parent=5 // pred_check
        _
      $region34: #{dlinear_forward.1} parent=5 // pred_check_branch
        %170 = sbr.rel (%p167) target = $region36
      $region35: #{dlinear_forward.1} parent=5 // pred_region
        %s171 = ssub.s32 %s14, 1
        %p172 = pneg %p35
        %p173 = pneg %p32
        %p174 = pneg %p56
        %p175 = pneg %p53
        %p176 = pneg %p77
        %p177 = pneg %p74
        %p178 = scmp.lt.s32.totalorder %s19, 1
        %s179 = scalar_select %p178, %s19, 1
        %s180 = smul.addr %s179, 4
        %s181 = smul.addr %s180, 8
        %s182 = scalar_lea.vmem %s3, %s181
        %p183 = pneg %p103
        %p184 = pneg %p100
        %p185 = pneg %p129
        %p186 = pneg %p126
        %s187 = sand.u32 %s116, 1
        %s188 = scalar_lea.sflag [#allocation4], %s187
        %s189 = sand.u32 %s116, 1
        %s190 = smul.addr %s189, 8
        %s191 = scalar_lea.vmem [#allocation3], %s190
        %p192 = scmp.lt.s32.totalorder %s19, 1
        %s193 = scalar_select %p192, %s19, 1
        %s194 = smul.addr %s193, 4
        %s195 = smul.addr %s194, 8
        %s196 = scalar_lea.vmem %s3, %s195
        %v198 = vld [vmem:[%s196] sm:$0xff]
        %v199 = vld [vmem:[%s196 + $0x8] sm:$0xff]
        %v200 = vld [vmem:[%s196 + $0x10] sm:$0xff]
        %v201 = vld [vmem:[%s196 + $0x18] sm:$0xff]
        %v202 = vld [vmem:[%s0] sm:$0xf]
        %v204 = vlaneseq
        %v205 = vshrl.u32 %v204, 7
        %v206 = vsub.s32 0, %v205
        %v207 = vrot.slane %v202, %v206
        %v208 = vlaneseq
        %v209 = vshrl.u32 %v208, 7
        %v210 = vsub.s32 1, %v209
        %v211 = vrot.slane %v202, %v210
        %v212 = vlaneseq
        %v213 = vshrl.u32 %v212, 7
        %v214 = vsub.s32 2, %v213
        %v215 = vrot.slane %v202, %v214
        %v216 = vlaneseq
        %v217 = vshrl.u32 %v216, 7
        %v218 = vsub.s32 3, %v217
        %v219 = vrot.slane %v202, %v218
        %v224 = vmul.f32 %v198, %v207
        %v225 = vmul.f32 %v199, %v211
        %v226 = vmul.f32 %v200, %v215
        %v227 = vmul.f32 %v201, %v219
        %v228 = vpack.c.bf16 %v224, %v224
        %v229 = vpack.c.bf16 %v225, %v225
        %v230 = vpack.c.bf16 %v226, %v226
        %v231 = vpack.c.bf16 %v227, %v227
        %v232 = vunpack.c.l.bf16 %v228
        %v233 = vunpack.c.l.bf16 %v229
        %v234 = vunpack.c.l.bf16 %v230
        %v235 = vunpack.c.l.bf16 %v231
        %v236 = vsub.f32 %v224, %v232
        %v237 = vsub.f32 %v225, %v233
        %v238 = vsub.f32 %v226, %v234
        %v239 = vsub.f32 %v227, %v235
        %v240 = vpack.c.bf16 %v236, %v236
        %v241 = vpack.c.bf16 %v237, %v237
        %v242 = vpack.c.bf16 %v238, %v238
        %v243 = vpack.c.bf16 %v239, %v239
        %v244 = vld [vmem:[%s2] sm:$0xf]
        %v245 = vld [vmem:[%s2 + $0x4] sm:$0xf]
        %v246 = vld [vmem:[%s2 + $0x8] sm:$0xf]
        %v247 = vld [vmem:[%s2 + $0xc] sm:$0xf]
        %v248 = vld [vmem:[%s2 + $0x10] sm:$0xf]
        %v249 = vld [vmem:[%s2 + $0x14] sm:$0xf]
        %v250 = vld [vmem:[%s2 + $0x18] sm:$0xf]
        %v251 = vld [vmem:[%s2 + $0x1c] sm:$0xf]
        %v252 = vld [vmem:[%s2 + $0x20] sm:$0xf]
        %v253 = vld [vmem:[%s2 + $0x24] sm:$0xf]
        %v254 = vld [vmem:[%s2 + $0x28] sm:$0xf]
        %v255 = vld [vmem:[%s2 + $0x2c] sm:$0xf]
        %v256 = vld [vmem:[%s2 + $0x30] sm:$0xf]
        %v257 = vld [vmem:[%s2 + $0x34] sm:$0xf]
        %v258 = vld [vmem:[%s2 + $0x38] sm:$0xf]
        %v259 = vld [vmem:[%s2 + $0x3c] sm:$0xf]
        %v260 = vld [vmem:[%s2 + $0x40] sm:$0xf]
        %v261 = vld [vmem:[%s2 + $0x44] sm:$0xf]
        %v262 = vld [vmem:[%s2 + $0x48] sm:$0xf]
        %v263 = vld [vmem:[%s2 + $0x4c] sm:$0xf]
        %v264 = vld [vmem:[%s2 + $0x50] sm:$0xf]
        %v265 = vld [vmem:[%s2 + $0x54] sm:$0xf]
        %v266 = vld [vmem:[%s2 + $0x58] sm:$0xf]
        %v267 = vld [vmem:[%s2 + $0x5c] sm:$0xf]
        %v268 = vld [vmem:[%s2 + $0x60] sm:$0xf]
        %v269 = vld [vmem:[%s2 + $0x64] sm:$0xf]
        %v270 = vld [vmem:[%s2 + $0x68] sm:$0xf]
        %v271 = vld [vmem:[%s2 + $0x6c] sm:$0xf]
        %v272 = vld [vmem:[%s2 + $0x70] sm:$0xf]
        %v273 = vld [vmem:[%s2 + $0x74] sm:$0xf]
        %v274 = vld [vmem:[%s2 + $0x78] sm:$0xf]
        %v275 = vld [vmem:[%s2 + $0x7c] sm:$0xf]
        %v276 = vld [vmem:[%s2 + $0x80] sm:$0xf]
        %v277 = vld [vmem:[%s2 + $0x84] sm:$0xf]
        %v278 = vld [vmem:[%s2 + $0x88] sm:$0xf]
        %v279 = vld [vmem:[%s2 + $0x8c] sm:$0xf]
        %v280 = vld [vmem:[%s2 + $0x90] sm:$0xf]
        %v281 = vld [vmem:[%s2 + $0x94] sm:$0xf]
        %v282 = vld [vmem:[%s2 + $0x98] sm:$0xf]
        %v283 = vld [vmem:[%s2 + $0x9c] sm:$0xf]
        %v284 = vld [vmem:[%s2 + $0xa0] sm:$0xf]
        %v285 = vld [vmem:[%s2 + $0xa4] sm:$0xf]
        %v286 = vld [vmem:[%s2 + $0xa8] sm:$0xf]
        %v287 = vld [vmem:[%s2 + $0xac] sm:$0xf]
        %v288 = vld [vmem:[%s2 + $0xb0] sm:$0xf]
        %v289 = vld [vmem:[%s2 + $0xb4] sm:$0xf]
        %v290 = vld [vmem:[%s2 + $0xb8] sm:$0xf]
        %v291 = vld [vmem:[%s2 + $0xbc] sm:$0xf]
        %v292 = vld [vmem:[%s2 + $0xc0] sm:$0xf]
        %v293 = vld [vmem:[%s2 + $0xc4] sm:$0xf]
        %v294 = vld [vmem:[%s2 + $0xc8] sm:$0xf]
        %v295 = vld [vmem:[%s2 + $0xcc] sm:$0xf]
        %v296 = vld [vmem:[%s2 + $0xd0] sm:$0xf]
        %v297 = vld [vmem:[%s2 + $0xd4] sm:$0xf]
        %v298 = vld [vmem:[%s2 + $0xd8] sm:$0xf]
        %v299 = vld [vmem:[%s2 + $0xdc] sm:$0xf]
        %v300 = vld [vmem:[%s2 + $0xe0] sm:$0xf]
        %v301 = vld [vmem:[%s2 + $0xe4] sm:$0xf]
        %v302 = vld [vmem:[%s2 + $0xe8] sm:$0xf]
        %v303 = vld [vmem:[%s2 + $0xec] sm:$0xf]
        %v304 = vld [vmem:[%s2 + $0xf0] sm:$0xf]
        %v305 = vld [vmem:[%s2 + $0xf4] sm:$0xf]
        %v306 = vld [vmem:[%s2 + $0xf8] sm:$0xf]
        %v307 = vld [vmem:[%s2 + $0xfc] sm:$0xf]
        %v372 = vunpack.c.l.b16 %v244
        %v373 = vunpack.c.l.b16 %v245
        %v374 = vunpack.c.l.b16 %v246
        %v375 = vunpack.c.l.b16 %v247
        %v376 = vunpack.c.l.b16 %v248
        %v377 = vunpack.c.l.b16 %v249
        %v378 = vunpack.c.l.b16 %v250
        %v379 = vunpack.c.l.b16 %v251
        %v380 = vunpack.c.l.b16 %v252
        %v381 = vunpack.c.l.b16 %v253
        %v382 = vunpack.c.l.b16 %v254
        %v383 = vunpack.c.l.b16 %v255
        %v384 = vunpack.c.l.b16 %v256
        %v385 = vunpack.c.l.b16 %v257
        %v386 = vunpack.c.l.b16 %v258
        %v387 = vunpack.c.l.b16 %v259
        %v388 = vunpack.c.l.b16 %v260
        %v389 = vunpack.c.l.b16 %v261
        %v390 = vunpack.c.l.b16 %v262
        %v391 = vunpack.c.l.b16 %v263
        %v392 = vunpack.c.l.b16 %v264
        %v393 = vunpack.c.l.b16 %v265
        %v394 = vunpack.c.l.b16 %v266
        %v395 = vunpack.c.l.b16 %v267
        %v396 = vunpack.c.l.b16 %v268
        %v397 = vunpack.c.l.b16 %v269
        %v398 = vunpack.c.l.b16 %v270
        %v399 = vunpack.c.l.b16 %v271
        %v400 = vunpack.c.l.b16 %v272
        %v401 = vunpack.c.l.b16 %v273
        %v402 = vunpack.c.l.b16 %v274
        %v403 = vunpack.c.l.b16 %v275
        %v404 = vunpack.c.l.b16 %v276
        %v405 = vunpack.c.l.b16 %v277
        %v406 = vunpack.c.l.b16 %v278
        %v407 = vunpack.c.l.b16 %v279
        %v408 = vunpack.c.l.b16 %v280
        %v409 = vunpack.c.l.b16 %v281
        %v410 = vunpack.c.l.b16 %v282
        %v411 = vunpack.c.l.b16 %v283
        %v412 = vunpack.c.l.b16 %v284
        %v413 = vunpack.c.l.b16 %v285
        %v414 = vunpack.c.l.b16 %v286
        %v415 = vunpack.c.l.b16 %v287
        %v416 = vunpack.c.l.b16 %v288
        %v417 = vunpack.c.l.b16 %v289
        %v418 = vunpack.c.l.b16 %v290
        %v419 = vunpack.c.l.b16 %v291
        %v420 = vunpack.c.l.b16 %v292
        %v421 = vunpack.c.l.b16 %v293
        %v422 = vunpack.c.l.b16 %v294
        %v423 = vunpack.c.l.b16 %v295
        %v424 = vunpack.c.l.b16 %v296
        %v425 = vunpack.c.l.b16 %v297
        %v426 = vunpack.c.l.b16 %v298
        %v427 = vunpack.c.l.b16 %v299
        %v428 = vunpack.c.l.b16 %v300
        %v429 = vunpack.c.l.b16 %v301
        %v430 = vunpack.c.l.b16 %v302
        %v431 = vunpack.c.l.b16 %v303
        %v432 = vunpack.c.l.b16 %v304
        %v433 = vunpack.c.l.b16 %v305
        %v434 = vunpack.c.l.b16 %v306
        %v435 = vunpack.c.l.b16 %v307
        %v436 = vpack.c.b16 %v373, %v372
        %v437 = vpack.c.b16 %v375, %v374
        %v438 = vpack.c.b16 %v377, %v376
        %v439 = vpack.c.b16 %v379, %v378
        %v440 = vpack.c.b16 %v381, %v380
        %v441 = vpack.c.b16 %v383, %v382
        %v442 = vpack.c.b16 %v385, %v384
        %v443 = vpack.c.b16 %v387, %v386
        %v444 = vpack.c.b16 %v389, %v388
        %v445 = vpack.c.b16 %v391, %v390
        %v446 = vpack.c.b16 %v393, %v392
        %v447 = vpack.c.b16 %v395, %v394
        %v448 = vpack.c.b16 %v397, %v396
        %v449 = vpack.c.b16 %v399, %v398
        %v450 = vpack.c.b16 %v401, %v400
        %v451 = vpack.c.b16 %v403, %v402
        %v452 = vpack.c.b16 %v405, %v404
        %v453 = vpack.c.b16 %v407, %v406
        %v454 = vpack.c.b16 %v409, %v408
        %v455 = vpack.c.b16 %v411, %v410
        %v456 = vpack.c.b16 %v413, %v412
        %v457 = vpack.c.b16 %v415, %v414
        %v458 = vpack.c.b16 %v417, %v416
        %v459 = vpack.c.b16 %v419, %v418
        %v460 = vpack.c.b16 %v421, %v420
        %v461 = vpack.c.b16 %v423, %v422
        %v462 = vpack.c.b16 %v425, %v424
        %v463 = vpack.c.b16 %v427, %v426
        %v464 = vpack.c.b16 %v429, %v428
        %v465 = vpack.c.b16 %v431, %v430
        %v466 = vpack.c.b16 %v433, %v432
        %v467 = vpack.c.b16 %v435, %v434
        %500 = vmatprep.subr.bf16.mxu0 0
        %501 = vmatpush1.bf16.msra.mxu0 %v436
        %502 = vmatprep.subr.bf16.mxu0 0
        %503 = vmatpush1.bf16.msra.mxu0 %v437
        %504 = vmatprep.subr.bf16.mxu0 0
        %505 = vmatpush1.bf16.msra.mxu0 %v438
        %506 = vmatprep.subr.bf16.mxu0 0
        %507 = vmatpush1.bf16.msra.mxu0 %v439
        %508 = vmatprep.subr.bf16.mxu0 0
        %509 = vmatpush1.bf16.msra.mxu0 %v440
        %510 = vmatprep.subr.bf16.mxu0 0
        %511 = vmatpush1.bf16.msra.mxu0 %v441
        %512 = vmatprep.subr.bf16.mxu0 0
        %513 = vmatpush1.bf16.msra.mxu0 %v442
        %514 = vmatprep.subr.bf16.mxu0 0
        %515 = vmatpush1.bf16.msra.mxu0 %v443
        %516 = vmatprep.subr.bf16.mxu0 0
        %517 = vmatpush1.bf16.msra.mxu0 %v444
        %518 = vmatprep.subr.bf16.mxu0 0
        %519 = vmatpush1.bf16.msra.mxu0 %v445
        %520 = vmatprep.subr.bf16.mxu0 0
        %521 = vmatpush1.bf16.msra.mxu0 %v446
        %522 = vmatprep.subr.bf16.mxu0 0
        %523 = vmatpush1.bf16.msra.mxu0 %v447
        %524 = vmatprep.subr.bf16.mxu0 0
        %525 = vmatpush1.bf16.msra.mxu0 %v448
        %526 = vmatprep.subr.bf16.mxu0 0
        %527 = vmatpush1.bf16.msra.mxu0 %v449
        %528 = vmatprep.subr.bf16.mxu0 0
        %529 = vmatpush1.bf16.msra.mxu0 %v450
        %530 = vmatprep.subr.bf16.mxu0 0
        %531 = vmatpush1.bf16.msra.mxu0 %v451
        %532 = vmatprep.mubr.bf16.mxu0 %v241
        %533 = vmatmul.mubr.bf16.gmra.mrb[0].mxu0 %v240
        %v534 = vpop.f32.mrb[0].mxu0
        %v535 = vadd.f32 0.0, %v534
        %v536 = vpop.f32.mrb[0].mxu0
        %v537 = vpop.f32.mrb[0].mxu0
        %v538 = vpop.f32.mrb[0].mxu0
        %539 = vdwg.mxu0
        %540 = vmatprep.subr.bf16.mxu0 0
        %541 = vmatpush1.bf16.msra.mxu0 %v452
        %542 = vmatprep.subr.bf16.mxu0 0
        %543 = vmatpush1.bf16.msra.mxu0 %v453
        %544 = vmatprep.subr.bf16.mxu0 0
        %545 = vmatpush1.bf16.msra.mxu0 %v454
        %546 = vmatprep.subr.bf16.mxu0 0
        %547 = vmatpush1.bf16.msra.mxu0 %v455
        %548 = vmatprep.subr.bf16.mxu0 0
        %549 = vmatpush1.bf16.msra.mxu0 %v456
        %550 = vmatprep.subr.bf16.mxu0 0
        %551 = vmatpush1.bf16.msra.mxu0 %v457
        %552 = vmatprep.subr.bf16.mxu0 0
        %553 = vmatpush1.bf16.msra.mxu0 %v458
        %554 = vmatprep.subr.bf16.mxu0 0
        %555 = vmatpush1.bf16.msra.mxu0 %v459
        %556 = vmatprep.subr.bf16.mxu0 0
        %557 = vmatpush1.bf16.msra.mxu0 %v460
        %558 = vmatprep.subr.bf16.mxu0 0
        %559 = vmatpush1.bf16.msra.mxu0 %v461
        %560 = vmatprep.subr.bf16.mxu0 0
        %561 = vmatpush1.bf16.msra.mxu0 %v462
        %562 = vmatprep.subr.bf16.mxu0 0
        %563 = vmatpush1.bf16.msra.mxu0 %v463
        %564 = vmatprep.subr.bf16.mxu0 0
        %565 = vmatpush1.bf16.msra.mxu0 %v464
        %566 = vmatprep.subr.bf16.mxu0 0
        %567 = vmatpush1.bf16.msra.mxu0 %v465
        %568 = vmatprep.subr.bf16.mxu0 0
        %569 = vmatpush1.bf16.msra.mxu0 %v466
        %570 = vmatprep.subr.bf16.mxu0 0
        %571 = vmatpush1.bf16.msra.mxu0 %v467
        %572 = vmatprep.mubr.bf16.mxu0 %v243
        %573 = vmatmul.mubr.bf16.gmra.mrb[0].mxu0 %v242
        %v574 = vpop.f32.mrb[0].mxu0
        %v575 = vadd.f32 %v535, %v574
        %v576 = vpop.f32.mrb[0].mxu0
        %v577 = vpop.f32.mrb[0].mxu0
        %v578 = vpop.f32.mrb[0].mxu0
        %579 = vdwg.mxu0
        %580 = vmatprep.subr.bf16.mxu0 0
        %581 = vmatpush1.bf16.msra.mxu0 %v436
        %582 = vmatprep.subr.bf16.mxu0 0
        %583 = vmatpush1.bf16.msra.mxu0 %v437
        %584 = vmatprep.subr.bf16.mxu0 0
        %585 = vmatpush1.bf16.msra.mxu0 %v438
        %586 = vmatprep.subr.bf16.mxu0 0
        %587 = vmatpush1.bf16.msra.mxu0 %v439
        %588 = vmatprep.subr.bf16.mxu0 0
        %589 = vmatpush1.bf16.msra.mxu0 %v440
        %590 = vmatprep.subr.bf16.mxu0 0
        %591 = vmatpush1.bf16.msra.mxu0 %v441
        %592 = vmatprep.subr.bf16.mxu0 0
        %593 = vmatpush1.bf16.msra.mxu0 %v442
        %594 = vmatprep.subr.bf16.mxu0 0
        %595 = vmatpush1.bf16.msra.mxu0 %v443
        %596 = vmatprep.subr.bf16.mxu0 0
        %597 = vmatpush1.bf16.msra.mxu0 %v444
        %598 = vmatprep.subr.bf16.mxu0 0
        %599 = vmatpush1.bf16.msra.mxu0 %v445
        %600 = vmatprep.subr.bf16.mxu0 0
        %601 = vmatpush1.bf16.msra.mxu0 %v446
        %602 = vmatprep.subr.bf16.mxu0 0
        %603 = vmatpush1.bf16.msra.mxu0 %v447
        %604 = vmatprep.subr.bf16.mxu0 0
        %605 = vmatpush1.bf16.msra.mxu0 %v448
        %606 = vmatprep.subr.bf16.mxu0 0
        %607 = vmatpush1.bf16.msra.mxu0 %v449
        %608 = vmatprep.subr.bf16.mxu0 0
        %609 = vmatpush1.bf16.msra.mxu0 %v450
        %610 = vmatprep.subr.bf16.mxu0 0
        %611 = vmatpush1.bf16.msra.mxu0 %v451
        %612 = vmatprep.mubr.bf16.mxu0 %v229
        %613 = vmatmul.mubr.bf16.gmra.mrb[0].mxu0 %v228
        %v614 = vpop.f32.mrb[0].mxu0
        %v615 = vadd.f32 %v575, %v614
        %v616 = vpop.f32.mrb[0].mxu0
        %v617 = vpop.f32.mrb[0].mxu0
        %v618 = vpop.f32.mrb[0].mxu0
        %619 = vdwg.mxu0
        %620 = vmatprep.subr.bf16.mxu0 0
        %621 = vmatpush1.bf16.msra.mxu0 %v452
        %622 = vmatprep.subr.bf16.mxu0 0
        %623 = vmatpush1.bf16.msra.mxu0 %v453
        %624 = vmatprep.subr.bf16.mxu0 0
        %625 = vmatpush1.bf16.msra.mxu0 %v454
        %626 = vmatprep.subr.bf16.mxu0 0
        %627 = vmatpush1.bf16.msra.mxu0 %v455
        %628 = vmatprep.subr.bf16.mxu0 0
        %629 = vmatpush1.bf16.msra.mxu0 %v456
        %630 = vmatprep.subr.bf16.mxu0 0
        %631 = vmatpush1.bf16.msra.mxu0 %v457
        %632 = vmatprep.subr.bf16.mxu0 0
        %633 = vmatpush1.bf16.msra.mxu0 %v458
        %634 = vmatprep.subr.bf16.mxu0 0
        %635 = vmatpush1.bf16.msra.mxu0 %v459
        %636 = vmatprep.subr.bf16.mxu0 0
        %637 = vmatpush1.bf16.msra.mxu0 %v460
        %638 = vmatprep.subr.bf16.mxu0 0
        %639 = vmatpush1.bf16.msra.mxu0 %v461
        %640 = vmatprep.subr.bf16.mxu0 0
        %641 = vmatpush1.bf16.msra.mxu0 %v462
        %642 = vmatprep.subr.bf16.mxu0 0
        %643 = vmatpush1.bf16.msra.mxu0 %v463
        %644 = vmatprep.subr.bf16.mxu0 0
        %645 = vmatpush1.bf16.msra.mxu0 %v464
        %646 = vmatprep.subr.bf16.mxu0 0
        %647 = vmatpush1.bf16.msra.mxu0 %v465
        %648 = vmatprep.subr.bf16.mxu0 0
        %649 = vmatpush1.bf16.msra.mxu0 %v466
        %650 = vmatprep.subr.bf16.mxu0 0
        %651 = vmatpush1.bf16.msra.mxu0 %v467
        %652 = vmatprep.mubr.bf16.mxu0 %v231
        %653 = vmatmul.mubr.bf16.gmra.mrb[0].mxu0 %v230
        %v654 = vpop.f32.mrb[0].mxu0
        %v655 = vadd.f32 %v615, %v654
        %v656 = vpop.f32.mrb[0].mxu0
        %v657 = vpop.f32.mrb[0].mxu0
        %v658 = vpop.f32.mrb[0].mxu0
        %659 = vdwg.mxu0
        %s660 = sld [smem:[#allocation2]]
        %v661 = vstv %s660
        %v662 = vadd.f32 %v655, %v661
        %663 = vst [vmem:[%s191] sm:$0xff] %v662
        %s664 = sand.u32 %s116, 1
        %s665 = scalar_lea.sflag [#allocation4], %s664
        %s666 = sand.u32 %s116, 1
        %s667 = smul.addr %s666, 8
        %s668 = scalar_lea.vmem [#allocation3], %s667
        // Predicated region
        $region37: #{dlinear_forward.1} parent=35 // pred_check
          %p669 = pneg %p126
        $region38: #{dlinear_forward.1} parent=35 // pred_check_branch
          %671 = sbr.rel (%p669) target = $region40
        $region39: #{dlinear_forward.1} parent=35 // pred_region
          %s673 = ssub.s32 128, 128
          %674 = vsyncadd %s665, %s673
          %s675 = smul.addr %s19, 128
          %s676 = scalar_lea.hbm %s4, %s675
          %s678 = sshll.u32 %s668, 4
          %s679 = int_to_ptr.vmem [resolvable:$true] %s678
          %681 = dma.vmem_to_hbm [thread:$0]  %s679, 128, %s676, %s665
        $region40: #{dlinear_forward.1} parent=35 // pred_fallthru
          _
      $region36: #{dlinear_forward.1} parent=5 // pred_fallthru
        _
      %p682 = scmp.le.s32.totalorder 2, %s14
      // Predicated region
      $region41: #{dlinear_forward.1} parent=5 // pred_check
        %p683 = pneg %p682
      $region42: #{dlinear_forward.1} parent=5 // pred_check_branch
        %685 = sbr.rel (%p683) target = $region44
      $region43: #{dlinear_forward.1} parent=5 // pred_region
        %s686 = ssub.s32 %s14, 2
        // Predicated region
        $region45: #{dlinear_forward.1} parent=43 // pred_check
          %p687 = pneg %p132
        $region46: #{dlinear_forward.1} parent=43 // pred_check_branch
          %689 = sbr.rel (%p687) target = $region48
        $region47: #{dlinear_forward.1} parent=43 // pred_region
          %s690 = sand.u32 %s117, 1
          %s691 = scalar_lea.sflag [#allocation4], %s690
          %s692 = sand.u32 %s117, 1
          %s693 = smul.addr %s692, 8
          %s694 = scalar_lea.vmem [#allocation3], %s693
          %695 = dma.done %s691, 128
        $region48: #{dlinear_forward.1} parent=43 // pred_fallthru
          _
      $region44: #{dlinear_forward.1} parent=5 // pred_fallthru
        _
    $region6: #{dlinear_forward.1} parent=1 // loop_footer
      %s18 = sadd.s32 1, %s14
    $region7: #{dlinear_forward.1} parent=1 // loop_footer_branch
      %13 = sbr.rel target = $region3
    $region8: #{dlinear_forward.1} parent=1 // loop_exit
      _
    %696 = vsyncpa [#allocation4], 1
    %s697 = scalar_lea.sflag [#allocation4], 1
    %698 = vsyncpa %s697, 1

</llo_original>
